<compile_context>
chip_gen: v5e
topology: v5e:2x2
jax: 0.10.0
libtpu: 0.0.40
codegen_flags: <defaults>
</compile_context>

<pallas_src>
import jax
import jax.numpy as jnp
from jax.experimental import pallas as pl
from jax.experimental.pallas import tpu as pltpu

ALPHA = 4.0                 # logistic rate-function steepness
_LANES = 128
_TARGET_BLOCK_ROWS = 2048   # ~1 MiB per f32 block


def _min_sublanes(dtype) -> int:
    """Minimum packed sublane multiple for a dtype (8 f32, 16 bf16, 32 int8)."""
    bits = jnp.dtype(dtype).itemsize * 8
    return max(8, 256 // bits)


def _round_up(x: int, m: int) -> int:
    return ((x + m - 1) // m) * m


# ----------------------------- Pallas kernels ------------------------------

def _rate_kernel(v_ref, o_ref):
    v = v_ref[...].astype(jnp.float32)
    o_ref[...] = jax.nn.sigmoid(ALPHA * v).astype(o_ref.dtype)


def _spiking_kernel(v_ref, bits_ref, o_ref):
    v = v_ref[...].astype(jnp.float32)
    rate = jax.nn.sigmoid(ALPHA * v)
    # Integer-domain Bernoulli: P(u24 < rate * 2^24) == rate for u24 ~ U[0, 2^24)
    thresh = (rate * 16777216.0).astype(jnp.uint32)
    u24 = bits_ref[...] >> jnp.uint32(8)
    o_ref[...] = (u24 < thresh).astype(o_ref.dtype)


# ------------------------------- wrappers -----------------------------------

def _to_slab(v):
    """Flatten to a lane-dense (rows, 128) slab. Pads only if numel % 128 != 0."""
    flat = v.reshape(-1)
    n = flat.shape[0]
    pad = (-n) % _LANES
    if pad:
        flat = jnp.pad(flat, (0, pad))
    return flat.reshape(-1, _LANES), pad


def _from_slab(out2d, v, pad):
    if pad:
        return out2d.reshape(-1)[: v.size].reshape(v.shape)
    return out2d.reshape(v.shape)


def _elementwise_call(kernel, out_dtype, *slabs):
    rows = slabs[0].shape[0]
    sub = _min_sublanes(slabs[0].dtype)
    block_rows = min(_round_up(_TARGET_BLOCK_ROWS, sub), _round_up(rows, sub))
    spec = pl.BlockSpec((block_rows, _LANES), lambda i: (i, 0))
    return pl.pallas_call(
        kernel,
        out_shape=jax.ShapeDtypeStruct((rows, _LANES), out_dtype),
        grid=(pl.cdiv(rows, block_rows),),
        in_specs=[spec] * len(slabs),
        out_specs=spec,
        compiler_params=pltpu.CompilerParams(
            dimension_semantics=("parallel",)),
    )(*slabs)


def rate_function(v):
    v2d, pad = _to_slab(v)
    out = _elementwise_call(_rate_kernel, v.dtype, v2d)
    return _from_slab(out, v, pad)


def spiking_function(v, key):
    v2d, pad = _to_slab(v)
    bits = jax.random.bits(key, v2d.shape, dtype=jnp.uint32)
    out = _elementwise_call(_spiking_kernel, v.dtype, v2d, bits)
    return _from_slab(out, v, pad)


class LogisticStochasticFiring:
    """JAX/Pallas equivalent of a concrete BaseStochasticFiring subclass."""

    def __init__(self, spiking: bool = True, seed: int = 0):
        self._spiking = spiking
        self._key = jax.random.PRNGKey(seed)

    @property
    def spiking(self) -> bool:
        return self._spiking

    @spiking.setter
    def spiking(self, spk: bool):
        self._spiking = spk

    def __call__(self, v):
        # Mirrors BaseStochasticFiring.forward's Python-level dispatch.
        if self._spiking:
            # Fresh subkey per forward call (deterministic given the seed).
            self._key, sub = jax.random.split(self._key)
            return spiking_function(v, sub)
        return rate_function(v)


# --------------------------------- main --------------------------------------

if __name__ == "__main__":
    key = jax.random.PRNGKey(0)
    # Small membrane-potential tensor in NCHW convention.
    v = jax.random.normal(key, (2, 4, 16, 16), dtype=jnp.float32)

    module = LogisticStochasticFiring(spiking=True, seed=0)

    spikes = jax.block_until_ready(module(v))          # spiking path
    module.spiking = False
    rates = jax.block_until_ready(module(v))           # rate path

    # Sanity checks against the forward semantics.
    assert spikes.shape == v.shape and rates.shape == v.shape
    assert spikes.dtype == v.dtype and rates.dtype == v.dtype
    # Spikes are binary.
    assert bool(jnp.all((spikes == 0.0) | (spikes == 1.0)))
    # Rates match sigmoid(alpha * v).
    ref_rates = jax.nn.sigmoid(ALPHA * v)
    assert bool(jnp.allclose(rates, ref_rates, atol=1e-5, rtol=1e-5))
    # Loose statistical check: empirical firing rate tracks the mean rate.
    assert abs(float(spikes.mean()) - float(ref_rates.mean())) < 0.1

    print("KERNEL_OK")
</pallas_src>

<mosaic_0001>
module attributes {stable_mosaic.version = 11 : i64} {
  func.func @_spiking_kernel(%arg0: i32, %arg1: memref<16x128xf32, #tpu.memory_space<vmem>>, %arg2: memref<16x128xi32, #tpu.memory_space<vmem>>, %arg3: memref<16x128xf32, #tpu.memory_space<vmem>>) attributes {dimension_semantics = [#tpu.dimension_semantics<parallel>], iteration_bounds = array<i64: 1>, scalar_prefetch = 0 : i64, scratch_operands = 0 : i64, tpu.core_type = #tpu.core_type<tc>, window_params = [{transform_indices = @transform_0, window_bounds = array<i64: 16, 128>}, {transform_indices = @transform_1, window_bounds = array<i64: 16, 128>}, {transform_indices = @transform_2, window_bounds = array<i64: 16, 128>}]} {
    %c0 = arith.constant 0 : index
    %c0_0 = arith.constant 0 : index
    %0 = vector.load %arg1[%c0, %c0_0] : memref<16x128xf32, #tpu.memory_space<vmem>>, vector<16x128xf32>
    %cst = arith.constant 4.000000e+00 : f32
    %1 = vector.broadcast %cst : f32 to vector<16x128xf32>
    %2 = arith.mulf %1, %0 : vector<16x128xf32>
    %3 = arith.negf %2 : vector<16x128xf32>
    %4 = math.exp %3 : vector<16x128xf32>
    %cst_1 = arith.constant 1.000000e+00 : f32
    %5 = vector.broadcast %cst_1 : f32 to vector<16x128xf32>
    %6 = arith.addf %5, %4 : vector<16x128xf32>
    %7 = arith.divf %5, %6 : vector<16x128xf32>
    %cst_2 = arith.constant 0x4B800000 : f32
    %8 = vector.broadcast %cst_2 : f32 to vector<16x128xf32>
    %9 = arith.mulf %7, %8 : vector<16x128xf32>
    %10 = arith.fptoui %9 : vector<16x128xf32> to vector<16x128xi32>
    %c0_3 = arith.constant 0 : index
    %c0_4 = arith.constant 0 : index
    %11 = vector.load %arg2[%c0_3, %c0_4] : memref<16x128xi32, #tpu.memory_space<vmem>>, vector<16x128xi32>
    %c8_i32 = arith.constant 8 : i32
    %12 = vector.broadcast %c8_i32 : i32 to vector<16x128xi32>
    %13 = arith.shrui %11, %12 : vector<16x128xi32>
    %14 = arith.cmpi ult, %13, %10 : vector<16x128xi32>
    %15 = arith.extui %14 : vector<16x128xi1> to vector<16x128xi32>
    %16 = arith.sitofp %15 : vector<16x128xi32> to vector<16x128xf32>
    %c0_5 = arith.constant 0 : index
    %c0_6 = arith.constant 0 : index
    %17 = vector.load %arg3[%c0_5, %c0_6] : memref<16x128xf32, #tpu.memory_space<vmem>>, vector<16x128xf32>
    tpu.vector_store %arg3[%c0_5, %c0_6], %16 {strides = array<i32>} : memref<16x128xf32, #tpu.memory_space<vmem>>, vector<16x128xf32>,
    return
  }
  func.func @transform_0(%arg0: i32) -> (i32, i32) {
    %c0_i32 = arith.constant 0 : i32
    %c0_i32_0 = arith.constant 0 : i32
    return %arg0, %c0_i32 : i32, i32
  }
  func.func @transform_1(%arg0: i32) -> (i32, i32) {
    %c0_i32 = arith.constant 0 : i32
    %c0_i32_0 = arith.constant 0 : i32
    return %arg0, %c0_i32 : i32, i32
  }
  func.func @transform_2(%arg0: i32) -> (i32, i32) {
    %c0_i32 = arith.constant 0 : i32
    %c0_i32_0 = arith.constant 0 : i32
    return %arg0, %c0_i32 : i32, i32
  }
}

</mosaic_0001>

<llo_original>
// kernel: tpu_custom_call.1
$region0: #{tpu_custom_call.1}
  #allocation0 [shape = 'u32[]', space=smem, size = 0x4, offset = 0x4, fixed_abs, tag = 'smem constant byte address 0x4 - core index']
  #allocation1 [shape = 'u32[72,128]{1,0:T(1,128)}', space=vmem, size = 0x9000, scoped, tag = 'internal scratch']
  %s0 = inlined_call_operand.hbm [shape: f32[16,128], index: 0, kind: input, shape index: {}]
  %s1 = inlined_call_operand.hbm [shape: u32[16,128], index: 1, kind: input, shape index: {}]
  %s2 = inlined_call_operand.hbm [shape: f32[16,128], index: 2, kind: output, shape index: {}]
  %s3 = sld [smem:[#allocation0]]
  $region26: #{tpu_custom_call.1} parent=0
    _
  %s5 = ssub.s32 1, %s3
  %s6 = scalar_select 0, %s5, %s3
  $region1: #{tpu_custom_call.1} parent=0
    #allocation2 [shape = 'u8[8192]{0}', space=vmem, size = 0x2000, scoped, tag = 'input window, operand 0, single buffered']
    #allocation3 [shape = 's32[1]{0}', space=sflag, size = 0x4, scoped, tag = 'scoped memory for tpu_custom_call.1']
    #allocation4 [shape = 's32[1]{0}', space=sflag, size = 0x4, scoped, tag = 'scoped memory for tpu_custom_call.1']
    #allocation5 [shape = 'u8[8192]{0}', space=vmem, size = 0x2000, scoped, tag = 'input window, operand 1, single buffered']
    #allocation6 [shape = 's32[1]{0}', space=sflag, size = 0x4, scoped, tag = 'scoped memory for tpu_custom_call.1']
    #allocation7 [shape = 'u8[8192]{0}', space=vmem, size = 0x2000, scoped, tag = 'output window, operand 0, single buffered']
    %7 = vsyncpa [#allocation3], 0
    %8 = vsyncpa [#allocation6], 0
    %9 = vsyncpa [#allocation4], 0
    // Predicated region
    $region2: #{tpu_custom_call.1} parent=1 // pred_check
      _
    $region3: #{tpu_custom_call.1} parent=1 // pred_check_branch
      %11 = sbr.rel (0) target = $region5
    $region4: #{tpu_custom_call.1} parent=1 // pred_region
      %13 = vsyncadd [#allocation3], 0
      %s14 = sshll.u32 %s0, 4
      %s15 = int_to_ptr.hbm [resolvable:$true] %s14
      %s16 = sshll.u32 [#allocation2], 4
      %s17 = int_to_ptr.vmem [resolvable:$true] %s16
      %22 = dma.hbm_to_vmem [thread:$0]  %s15, 256, %s17, [#allocation3], 128, 128, 8
    $region5: #{tpu_custom_call.1} parent=1 // pred_fallthru
      _
    // Predicated region
    $region6: #{tpu_custom_call.1} parent=1 // pred_check
      _
    $region7: #{tpu_custom_call.1} parent=1 // pred_check_branch
      %24 = sbr.rel (0) target = $region9
    $region8: #{tpu_custom_call.1} parent=1 // pred_region
      %26 = vsyncadd [#allocation6], 0
      %s27 = sshll.u32 %s1, 4
      %s28 = int_to_ptr.hbm [resolvable:$true] %s27
      %s29 = sshll.u32 [#allocation5], 4
      %s30 = int_to_ptr.vmem [resolvable:$true] %s29
      %35 = dma.hbm_to_vmem [thread:$0]  %s28, 256, %s30, [#allocation6], 128, 128, 8
    $region9: #{tpu_custom_call.1} parent=1 // pred_fallthru
      _
    // Predicated region
    $region10: #{tpu_custom_call.1} parent=1 // pred_check
      _
    $region11: #{tpu_custom_call.1} parent=1 // pred_check_branch
      %37 = sbr.rel (0) target = $region13
    $region12: #{tpu_custom_call.1} parent=1 // pred_region
      %39 = dma.done [#allocation3], 256
    $region13: #{tpu_custom_call.1} parent=1 // pred_fallthru
      _
    // Predicated region
    $region14: #{tpu_custom_call.1} parent=1 // pred_check
      _
    $region15: #{tpu_custom_call.1} parent=1 // pred_check_branch
      %41 = sbr.rel (0) target = $region17
    $region16: #{tpu_custom_call.1} parent=1 // pred_region
      %43 = dma.done [#allocation6], 256
    $region17: #{tpu_custom_call.1} parent=1 // pred_fallthru
      _
    %v44 = vld [vmem:[#allocation2] sm:$0xff]
    %v45 = vld [vmem:[#allocation2 + $0x8] sm:$0xff]
    %v46 = vmul.f32 %v44, 4.0
    %v47 = vmul.f32 %v45, 4.0
    %v48 = vxor.u32 %v46, 2147483648
    %v49 = vxor.u32 %v47, 2147483648
    %v50 = vmul.f32 %v48, 1.442695
    %v51 = vpow.pop %v50
    %v52 = vmul.f32 %v49, 1.442695
    %v53 = vpow.pop %v52
    %v54 = vadd.f32 %v51, 1.0
    %v55 = vadd.f32 %v53, 1.0
    %v56 = vrcp.pop %v54
    %v57 = vmul.f32 %v54, %v56
    %v58 = vsub.f32 1.0, %v57
    %v59 = vmul.f32 %v56, %v58
    %v60 = vadd.f32 %v56, %v59
    %vm61 = vweird.f32 %v54
    %vm62 = vweird.f32 %v56
    %vm63 = vmor %vm61, %vm62
    %v64 = vsel %vm63, %v56, %v60
    %v65 = vand.u32 2147483647, %v54
    %vm66 = vcmp.eq.f32.partialorder %v65, 8.507059e+37
    %v67 = vand.u32 %v54, 2147483648
    %v68 = vor.u32 1.1754944e-38, %v67
    %v69 = vsel %vm66, %v68, %v64
    %v70 = vmul.f32 1.0, %v69
    %v71 = vrcp.pop %v55
    %v72 = vmul.f32 %v55, %v71
    %v73 = vsub.f32 1.0, %v72
    %v74 = vmul.f32 %v71, %v73
    %v75 = vadd.f32 %v71, %v74
    %vm76 = vweird.f32 %v55
    %vm77 = vweird.f32 %v71
    %vm78 = vmor %vm76, %vm77
    %v79 = vsel %vm78, %v71, %v75
    %v80 = vand.u32 2147483647, %v55
    %vm81 = vcmp.eq.f32.partialorder %v80, 8.507059e+37
    %v82 = vand.u32 %v55, 2147483648
    %v83 = vor.u32 1.1754944e-38, %v82
    %v84 = vsel %vm81, %v83, %v79
    %v85 = vmul.f32 1.0, %v84
    %v86 = vmul.f32 %v70, 16777216.0
    %v87 = vmul.f32 %v85, 16777216.0
    %v88 = vmax.f32 %v86, 0.0
    %v89 = vsub.f32 %v88, 2.1474836e+09
    %vm90 = vcmp.lt.s32.totalorder %v89, 0
    %v91 = vceil.f32 %v89
    %v92 = vfloor.f32 %v89
    %v93 = vsel %vm90, %v91, %v92
    %v94 = vcvt.f32.s32 %v93
    %v95 = vadd.s32 2147483648, %v94
    %vm96 = vcmp.lt.s32.totalorder %v88, 0
    %v97 = vceil.f32 %v88
    %v98 = vfloor.f32 %v88
    %v99 = vsel %vm96, %v97, %v98
    %v100 = vcvt.f32.s32 %v99
    %vm101 = vcmp.ge.f32.partialorder %v88, 2.1474836e+09
    %v102 = vsel %vm101, %v95, %v100
    %v103 = vmax.f32 %v87, 0.0
    %v104 = vsub.f32 %v103, 2.1474836e+09
    %vm105 = vcmp.lt.s32.totalorder %v104, 0
    %v106 = vceil.f32 %v104
    %v107 = vfloor.f32 %v104
    %v108 = vsel %vm105, %v106, %v107
    %v109 = vcvt.f32.s32 %v108
    %v110 = vadd.s32 2147483648, %v109
    %vm111 = vcmp.lt.s32.totalorder %v103, 0
    %v112 = vceil.f32 %v103
    %v113 = vfloor.f32 %v103
    %v114 = vsel %vm111, %v112, %v113
    %v115 = vcvt.f32.s32 %v114
    %vm116 = vcmp.ge.f32.partialorder %v103, 2.1474836e+09
    %v117 = vsel %vm116, %v110, %v115
    %v118 = vld [vmem:[#allocation5] sm:$0xff]
    %v119 = vld [vmem:[#allocation5 + $0x8] sm:$0xff]
    %v120 = vshrl.u32 %v118, 8
    %v121 = vshrl.u32 %v119, 8
    %v122 = vadd.s32 %v120, 2147483648
    %v123 = vadd.s32 %v102, 2147483648
    %vm124 = vcmp.lt.s32.totalorder %v122, %v123
    %v125 = vadd.s32 %v121, 2147483648
    %v126 = vadd.s32 %v117, 2147483648
    %vm127 = vcmp.lt.s32.totalorder %v125, %v126
    %v128 = vsel %vm124, 1, 0
    %v129 = vsel %vm127, 1, 0
    %v130 = vcvt.s32.f32 %v128
    %v131 = vcvt.s32.f32 %v129
    %132 = vst [vmem:[#allocation7] sm:$0xff] %v130
    %133 = vst [vmem:[#allocation7 + $0x8] sm:$0xff] %v131
    // Predicated region
    $region18: #{tpu_custom_call.1} parent=1 // pred_check
      _
    $region19: #{tpu_custom_call.1} parent=1 // pred_check_branch
      %135 = sbr.rel (0) target = $region21
    $region20: #{tpu_custom_call.1} parent=1 // pred_region
      %137 = vsyncadd [#allocation4], 0
      %s138 = sshll.u32 [#allocation7], 4
      %s139 = int_to_ptr.vmem [resolvable:$true] %s138
      %s140 = sshll.u32 %s2, 4
      %s141 = int_to_ptr.hbm [resolvable:$true] %s140
      %146 = dma.vmem_to_hbm [thread:$0]  %s139, 256, %s141, [#allocation4], 128, 128, 8
    $region21: #{tpu_custom_call.1} parent=1 // pred_fallthru
      _
    // Predicated region
    $region22: #{tpu_custom_call.1} parent=1 // pred_check
      _
    $region23: #{tpu_custom_call.1} parent=1 // pred_check_branch
      %148 = sbr.rel (0) target = $region25
    $region24: #{tpu_custom_call.1} parent=1 // pred_region
      %150 = dma.done [#allocation4], 256
    $region25: #{tpu_custom_call.1} parent=1 // pred_fallthru
      _
    %151 = vsyncpa [#allocation3], 1
    %152 = vsyncpa [#allocation6], 1
    %153 = vsyncpa [#allocation4], 1

</llo_original>
